<compile_context>
chip_gen: v6e
topology: v6e:2x2x1
jax: 0.10.0
libtpu: 0.0.40
codegen_flags: <defaults>
</compile_context>

<pallas_src>
import functools
import math

import jax
import jax.numpy as jnp
from jax import lax
from jax.experimental import pallas as pl
from jax.experimental.pallas import tpu as pltpu


_F32_INTERMEDIATE_TILES = 4          # pred_f32, exp(pred - m), target*pred, slack
_VMEM_BUDGET_BYTES = 32 * 1024 * 1024
_SMALL_PROBLEM_BYTES = 512 * 1024    # below this total input size, plain jnp is faster


def _sublane_align(itemsize: int) -> int:
    # 32-bit rows align to 8 sublanes; bf16 packs 2 rows/sublane (16); int8/fp8 -> 32.
    return max(8, 32 // max(1, itemsize))


def _round_up(x: int, m: int) -> int:
    return ((x + m - 1) // m) * m


def _choose_tile_rows(n: int, c: int, pred_isize: int, tgt_isize: int,
                      align: int, block_rows=None) -> int:
    """Pick the row-tile size from a VMEM budget that includes f32 intermediates."""
    if block_rows is not None:
        tile = max(align, _round_up(int(block_rows), align))
    else:
        # 2 pipeline buffers per input + ~4 f32 (TILE, C) intermediates.
        bytes_per_row = c * (2 * (pred_isize + tgt_isize) + 4 * _F32_INTERMEDIATE_TILES)
        tile = (_VMEM_BUDGET_BYTES // max(1, bytes_per_row)) // align * align
        tile = max(align, tile)
    # Never use a tile larger than the (sublane-aligned) problem itself.
    tile = min(tile, _round_up(n, align))
    return max(align, tile)


def _row_soft_ce(pred_ref, target_ref, *, tile_rows, n_rows, needs_mask):
    """Per-row soft cross entropy for one (TILE, C) tile, f32, shape (TILE, 1)."""
    pred = pred_ref[...].astype(jnp.float32)
    tgt = target_ref[...]                              # keep input dtype; promote on use
    m = jnp.max(pred, axis=-1, keepdims=True)
    lse = jnp.log(jnp.sum(jnp.exp(pred - m), axis=-1, keepdims=True))
    tgt_sum = jnp.sum(tgt, axis=-1, keepdims=True, dtype=jnp.float32)
    tgt_dot_pred = jnp.sum(tgt * pred, axis=-1, keepdims=True)   # promotes to f32
    # sum_c -t*(pred - m - lse) == (m + lse)*sum(t) - sum(t*pred)
    ce = (m + lse) * tgt_sum - tgt_dot_pred
    if needs_mask:
        row = (pl.program_id(0) * tile_rows
               + lax.broadcasted_iota(jnp.int32, (tile_rows, 1), 0))
        ce = jnp.where(row < n_rows, ce, 0.0)          # ragged tail rows contribute 0
    return ce


def _partial_sum_kernel(pred_ref, target_ref, out_ref, *, tile_rows, n_rows, needs_mask):
    ce = _row_soft_ce(pred_ref, target_ref, tile_rows=tile_rows,
                      n_rows=n_rows, needs_mask=needs_mask)
    out_ref[0, 0] = jnp.sum(ce)                        # per-tile partial sum (SMEM)


def _rows_kernel(pred_ref, target_ref, out_ref, *, tile_rows, n_rows, needs_mask):
    out_ref[...] = _row_soft_ce(pred_ref, target_ref, tile_rows=tile_rows,
                                n_rows=n_rows, needs_mask=needs_mask)


def _reference(pred, target, reduction):
    logp = jax.nn.log_softmax(pred.astype(jnp.float32), axis=-1)
    ce = jnp.sum(-target.astype(jnp.float32) * logp, axis=-1)
    if reduction == "mean":
        return jnp.mean(ce)
    if reduction == "sum":
        return jnp.sum(ce)
    return ce


def soft_target_cross_entropy_loss(pred: jax.Array, target: jax.Array,
                                   reduction: str = "mean", *,
                                   block_rows: int | None = None,
                                   force_pallas: bool = False) -> jax.Array:
    """Pallas TPU implementation of SoftTargetCrossEntropyLoss.forward."""
    if reduction not in ("mean", "sum", "none"):
        raise ValueError("{} is not a valid value for reduction".format(reduction))
    assert pred.shape == target.shape, (pred.shape, target.shape)

    lead_shape = pred.shape[:-1]
    c = pred.shape[-1]
    n = math.prod(lead_shape) if lead_shape else 1

    pred_isize = jnp.dtype(pred.dtype).itemsize
    tgt_isize = jnp.dtype(target.dtype).itemsize
    in_bytes = n * c * (pred_isize + tgt_isize)

    # Small-problem fallback: pallas_call fixed cost dominates; XLA's fused reduce wins.
    if not force_pallas and in_bytes < _SMALL_PROBLEM_BYTES:
        return _reference(pred, target, reduction)

    pred2d = pred.reshape(n, c)
    tgt2d = target.reshape(n, c)

    align = max(_sublane_align(pred_isize), _sublane_align(tgt_isize))
    tile = _choose_tile_rows(n, c, pred_isize, tgt_isize, align, block_rows)
    num_tiles = pl.cdiv(n, tile)
    needs_mask = (n % tile) != 0

    in_specs = [
        pl.BlockSpec((tile, c), lambda i: (i, 0)),
        pl.BlockSpec((tile, c), lambda i: (i, 0)),
    ]

    # Explicit VMEM limit: >= 48 MiB (v5e default scoped is only 16 MiB; v6e/v7x 32 MiB),
    # raised further if the intermediate-aware estimate needs it.
    est_vmem = tile * c * (2 * (pred_isize + tgt_isize) + 4 * _F32_INTERMEDIATE_TILES)
    vmem_limit = min(120 << 20, max(48 << 20, est_vmem + (8 << 20)))
    cparams = pltpu.CompilerParams(dimension_semantics=("parallel",),
                                   vmem_limit_bytes=vmem_limit)
    cost = pl.CostEstimate(flops=6 * n * c, transcendentals=n * c,
                           bytes_accessed=in_bytes + 4 * n)

    if reduction in ("mean", "sum"):
        kernel = functools.partial(_partial_sum_kernel, tile_rows=tile,
                                   n_rows=n, needs_mask=needs_mask)
        partials = pl.pallas_call(
            kernel,
            out_shape=jax.ShapeDtypeStruct((num_tiles, 1), jnp.float32),
            grid=(num_tiles,),
            in_specs=in_specs,
            out_specs=pl.BlockSpec((1, 1), lambda i: (i, 0), memory_space=pltpu.SMEM),
            compiler_params=cparams,
            cost_estimate=cost,
        )(pred2d, tgt2d)
        total = jnp.sum(partials)
        if reduction == "mean":
            return total / jnp.float32(n)
        return total

    # reduction == 'none'
    kernel = functools.partial(_rows_kernel, tile_rows=tile,
                               n_rows=n, needs_mask=needs_mask)
    ce = pl.pallas_call(
        kernel,
        out_shape=jax.ShapeDtypeStruct((num_tiles * tile, 1), jnp.float32),
        grid=(num_tiles,),
        in_specs=in_specs,
        out_specs=pl.BlockSpec((tile, 1), lambda i: (i, 0)),
        compiler_params=cparams,
        cost_estimate=cost,
    )(pred2d, tgt2d)
    return ce[:n, 0].reshape(lead_shape)


if __name__ == "__main__":
    key = jax.random.PRNGKey(0)
    k1, k2 = jax.random.split(key)
    # batch=2, seq=9, classes=32 -> n=18 rows: exercises the masked ragged tail.
    B, S, C = 2, 9, 32
    pred = jax.random.normal(k1, (B, S, C), dtype=jnp.float32)
    target = jax.nn.softmax(jax.random.normal(k2, (B, S, C), dtype=jnp.float32), axis=-1)

    logp_ref = jax.nn.log_softmax(pred, axis=-1)
    ce_ref = jnp.sum(-target * logp_ref, axis=-1)

    # mean: single ragged tile (auto tile size, in-kernel tail mask)
    out_mean = jax.block_until_ready(
        soft_target_cross_entropy_loss(pred, target, "mean", force_pallas=True))
    assert jnp.allclose(out_mean, jnp.mean(ce_ref), rtol=1e-5, atol=1e-5), (out_mean,)

    # sum: multi-tile grid (block_rows=8 -> 3 tiles) with masked last tile
    out_sum = jax.block_until_ready(
        soft_target_cross_entropy_loss(pred, target, "sum",
                                       block_rows=8, force_pallas=True))
    assert jnp.allclose(out_sum, jnp.sum(ce_ref), rtol=1e-5, atol=1e-5), (out_sum,)

    # none: per-row output, multi-tile grid, masked tail rows sliced off
    out_none = jax.block_until_ready(
        soft_target_cross_entropy_loss(pred, target, "none",
                                       block_rows=8, force_pallas=True))
    assert out_none.shape == (B, S)
    assert jnp.allclose(out_none, ce_ref, rtol=1e-5, atol=1e-5)

    # bf16 inputs: exercises the packed-dtype (16-row) sublane alignment path
    pred_bf = pred.astype(jnp.bfloat16)
    target_bf = target.astype(jnp.bfloat16)
    out_bf = jax.block_until_ready(
        soft_target_cross_entropy_loss(pred_bf, target_bf, "mean", force_pallas=True))
    ce_bf_ref = jnp.mean(jnp.sum(
        -target_bf.astype(jnp.float32)
        * jax.nn.log_softmax(pred_bf.astype(jnp.float32), axis=-1), axis=-1))
    assert jnp.allclose(out_bf, ce_bf_ref, rtol=2e-2, atol=2e-2), (out_bf, ce_bf_ref)

    # default path: small problem -> plain-jnp fallback, same answer
    out_auto = jax.block_until_ready(soft_target_cross_entropy_loss(pred, target))
    assert jnp.allclose(out_auto, jnp.mean(ce_ref), rtol=1e-5, atol=1e-5)

    print("KERNEL_OK")
</pallas_src>

<mosaic_0001>
module attributes {stable_mosaic.version = 11 : i64} {
  func.func @_partial_sum_kernel(%arg0: i32, %arg1: memref<24x32xf32, #tpu.memory_space<vmem>>, %arg2: memref<24x32xf32, #tpu.memory_space<vmem>>, %arg3: memref<1x1xf32, #tpu.memory_space<smem>>) attributes {dimension_semantics = [#tpu.dimension_semantics<parallel>], iteration_bounds = array<i64: 1>, scalar_prefetch = 0 : i64, scratch_operands = 0 : i64, tpu.core_type = #tpu.core_type<tc>, window_params = [{transform_indices = @transform_0, window_bounds = array<i64: 24, 32>}, {transform_indices = @transform_1, window_bounds = array<i64: 24, 32>}, {transform_indices = @transform_2, window_bounds = array<i64: 1, 1>}]} {
    %c0 = arith.constant 0 : index
    %c0_0 = arith.constant 0 : index
    %0 = vector.load %arg1[%c0, %c0_0] : memref<24x32xf32, #tpu.memory_space<vmem>>, vector<24x32xf32>
    %c0_1 = arith.constant 0 : index
    %c0_2 = arith.constant 0 : index
    %1 = vector.load %arg2[%c0_1, %c0_2] : memref<24x32xf32, #tpu.memory_space<vmem>>, vector<24x32xf32>
    %cst = arith.constant dense<0xFF800000> : vector<24xf32>
    %2 = vector.multi_reduction <maximumf>, %0, %cst [1] : vector<24x32xf32> to vector<24xf32>
    %3 = vector.shape_cast %2 : vector<24xf32> to vector<24x1xf32>
    %4 = vector.broadcast %3 : vector<24x1xf32> to vector<24x32xf32>
    %5 = arith.subf %0, %4 : vector<24x32xf32>
    %6 = math.exp %5 : vector<24x32xf32>
    %cst_3 = arith.constant dense<0.000000e+00> : vector<24xf32>
    %7 = vector.multi_reduction <add>, %6, %cst_3 [1] : vector<24x32xf32> to vector<24xf32>
    %8 = vector.shape_cast %7 : vector<24xf32> to vector<24x1xf32>
    %9 = math.log %8 : vector<24x1xf32>
    %cst_4 = arith.constant dense<0.000000e+00> : vector<24xf32>
    %10 = vector.multi_reduction <add>, %1, %cst_4 [1] : vector<24x32xf32> to vector<24xf32>
    %11 = vector.shape_cast %10 : vector<24xf32> to vector<24x1xf32>
    %12 = arith.mulf %1, %0 : vector<24x32xf32>
    %cst_5 = arith.constant dense<0.000000e+00> : vector<24xf32>
    %13 = vector.multi_reduction <add>, %12, %cst_5 [1] : vector<24x32xf32> to vector<24xf32>
    %14 = vector.shape_cast %13 : vector<24xf32> to vector<24x1xf32>
    %15 = arith.addf %3, %9 : vector<24x1xf32>
    %16 = arith.mulf %15, %11 : vector<24x1xf32>
    %17 = arith.subf %16, %14 : vector<24x1xf32>
    %c24_i32 = arith.constant 24 : i32
    %18 = arith.muli %arg0, %c24_i32 : i32
    %19 = tpu.iota {dimensions = array<i32: 0>} : vector<24x1xi32>
    %20 = vector.broadcast %18 : i32 to vector<24x1xi32>
    %21 = arith.addi %20, %19 : vector<24x1xi32>
    %c18_i32 = arith.constant 18 : i32
    %22 = vector.broadcast %c18_i32 : i32 to vector<24x1xi32>
    %23 = arith.cmpi slt, %21, %22 : vector<24x1xi32>
    %cst_6 = arith.constant 0.000000e+00 : f32
    %24 = vector.broadcast %cst_6 : f32 to vector<24x1xf32>
    %25 = arith.select %23, %17, %24 : vector<24x1xi1>, vector<24x1xf32>
    %26 = vector.shape_cast %25 : vector<24x1xf32> to vector<1x24x1xf32>
    %cst_7 = arith.constant dense<0.000000e+00> : vector<1xf32>
    %27 = vector.multi_reduction <add>, %26, %cst_7 [1, 2] : vector<1x24x1xf32> to vector<1xf32>
    %28 = vector.shape_cast %27 : vector<1xf32> to vector<1x1x1xf32>
    %29 = vector.extract %28[0, 0, 0] : f32 from vector<1x1x1xf32>
    %c0_8 = arith.constant 0 : index
    %c0_9 = arith.constant 0 : index
    %30 = memref.load %arg3[%c0_8, %c0_9] : memref<1x1xf32, #tpu.memory_space<smem>>
    memref.store %29, %arg3[%c0_8, %c0_9] : memref<1x1xf32, #tpu.memory_space<smem>>
    return
  }
  func.func @transform_0(%arg0: i32) -> (i32, i32) {
    %c0_i32 = arith.constant 0 : i32
    %c0_i32_0 = arith.constant 0 : i32
    return %arg0, %c0_i32 : i32, i32
  }
  func.func @transform_1(%arg0: i32) -> (i32, i32) {
    %c0_i32 = arith.constant 0 : i32
    %c0_i32_0 = arith.constant 0 : i32
    return %arg0, %c0_i32 : i32, i32
  }
  func.func @transform_2(%arg0: i32) -> (i32, i32) {
    %c0_i32 = arith.constant 0 : i32
    %c0_i32_0 = arith.constant 0 : i32
    return %arg0, %c0_i32 : i32, i32
  }
}

</mosaic_0001>

<llo_original>
// kernel: tpu_custom_call.1
$region0: #{tpu_custom_call.1}
  #allocation0 [shape = 'u32[]', space=smem, size = 0x4, offset = 0x4, fixed_abs, tag = 'smem constant byte address 0x4 - core index']
  #allocation1 [shape = 'u32[144,128]{1,0:T(1,128)}', space=vmem, size = 0x12000, scoped, tag = 'internal scratch']
  %s0 = inlined_call_operand.hbm [shape: f32[18,32], index: 0, kind: input, shape index: {}]
  %s1 = inlined_call_operand.hbm [shape: f32[18,32], index: 1, kind: input, shape index: {}]
  %s2 = inlined_call_operand.hbm [shape: f32[1,1], index: 2, kind: output, shape index: {}]
  %s3 = sld [smem:[#allocation0]]
  $region26: #{tpu_custom_call.1} parent=0
    _
  %s5 = ssub.s32 1, %s3
  %s6 = scalar_select 0, %s5, %s3
  $region1: #{tpu_custom_call.1} parent=0
    #allocation2 [shape = 'u8[12288]{0}', space=vmem, size = 0x3000, scoped, tag = 'input window, operand 0, single buffered']
    #allocation3 [shape = 's32[1]{0}', space=sflag, size = 0x4, scoped, tag = 'scoped memory for tpu_custom_call.1']
    #allocation4 [shape = 's32[1]{0}', space=sflag, size = 0x4, scoped, tag = 'scoped memory for tpu_custom_call.1']
    #allocation5 [shape = 'u8[12288]{0}', space=vmem, size = 0x3000, scoped, tag = 'input window, operand 1, single buffered']
    #allocation6 [shape = 's32[1]{0}', space=sflag, size = 0x4, scoped, tag = 'scoped memory for tpu_custom_call.1']
    #allocation7 [shape = 'u8[512]{0}', space=smem, size = 0x200, scoped, tag = 'output window, operand 0, single buffered']
    %7 = vsyncpa [#allocation3], 0
    %8 = vsyncpa [#allocation6], 0
    %9 = vsyncpa [#allocation4], 0
    // Predicated region
    $region2: #{tpu_custom_call.1} parent=1 // pred_check
      _
    $region3: #{tpu_custom_call.1} parent=1 // pred_check_branch
      %11 = sbr.rel (0) target = $region5
    $region4: #{tpu_custom_call.1} parent=1 // pred_region
      %s13 = ssub.s32 384, 384
      %14 = vsyncadd [#allocation3], %s13
      %s15 = sshll.u32 [#allocation2], 4
      %s16 = int_to_ptr.vmem [resolvable:$true] %s15
      %21 = dma.hbm_to_vmem [thread:$0]  %s0, 384, %s16, [#allocation3], 128, 128, 8
    $region5: #{tpu_custom_call.1} parent=1 // pred_fallthru
      _
    // Predicated region
    $region6: #{tpu_custom_call.1} parent=1 // pred_check
      _
    $region7: #{tpu_custom_call.1} parent=1 // pred_check_branch
      %23 = sbr.rel (0) target = $region9
    $region8: #{tpu_custom_call.1} parent=1 // pred_region
      %s25 = ssub.s32 384, 384
      %26 = vsyncadd [#allocation6], %s25
      %s27 = sshll.u32 [#allocation5], 4
      %s28 = int_to_ptr.vmem [resolvable:$true] %s27
      %33 = dma.hbm_to_vmem [thread:$0]  %s1, 384, %s28, [#allocation6], 128, 128, 8
    $region9: #{tpu_custom_call.1} parent=1 // pred_fallthru
      _
    // Predicated region
    $region10: #{tpu_custom_call.1} parent=1 // pred_check
      _
    $region11: #{tpu_custom_call.1} parent=1 // pred_check_branch
      %35 = sbr.rel (0) target = $region13
    $region12: #{tpu_custom_call.1} parent=1 // pred_region
      %36 = dma.done [#allocation3], 384
    $region13: #{tpu_custom_call.1} parent=1 // pred_fallthru
      _
    // Predicated region
    $region14: #{tpu_custom_call.1} parent=1 // pred_check
      _
    $region15: #{tpu_custom_call.1} parent=1 // pred_check_branch
      %38 = sbr.rel (0) target = $region17
    $region16: #{tpu_custom_call.1} parent=1 // pred_region
      %39 = dma.done [#allocation6], 384
    $region17: #{tpu_custom_call.1} parent=1 // pred_fallthru
      _
    %v40 = vld [vmem:[#allocation2] sm:$0xff]
    %v41 = vld [vmem:[#allocation2 + $0x8] sm:$0xff]
    %v42 = vld [vmem:[#allocation2 + $0x10] sm:$0xff]
    %v43 = vld [vmem:[#allocation5] sm:$0xff]
    %v44 = vld [vmem:[#allocation5 + $0x8] sm:$0xff]
    %v45 = vld [vmem:[#allocation5 + $0x10] sm:$0xff]
    %vm46 = vcmask 261120
    %v47 = vsel %vm46, %v40, -inf
    %48 = vmax.xlane.f32.xlu0 %v47
    %v49 = vpop.xlane.xlu0 %48
    %v50 = vsel %vm46, %v41, -inf
    %51 = vmax.xlane.f32.xlu0 %v50
    %v52 = vpop.xlane.xlu0 %51
    %v53 = vsel %vm46, %v42, -inf
    %54 = vmax.xlane.f32.xlu0 %v53
    %v55 = vpop.xlane.xlu0 %54
    %v56 = vsub.f32 %v40, %v49
    %v57 = vsub.f32 %v41, %v52
    %v58 = vsub.f32 %v42, %v55
    %v59 = vmul.f32 %v56, 1.442695
    %v60 = vpow.pop %v59
    %v61 = vmul.f32 %v57, 1.442695
    %v62 = vpow.pop %v61
    %v63 = vmul.f32 %v58, 1.442695
    %v64 = vpow.pop %v63
    %v65 = vsel %vm46, %v60, 0.0
    %66 = vadd.xlane.f32.xlu0 %v65
    %v67 = vpop.xlane.xlu0 %66
    %v68 = vsel %vm46, %v62, 0.0
    %69 = vadd.xlane.f32.xlu0 %v68
    %v70 = vpop.xlane.xlu0 %69
    %v71 = vsel %vm46, %v64, 0.0
    %72 = vadd.xlane.f32.xlu0 %v71
    %v73 = vpop.xlane.xlu0 %72
    %v74 = vlog2.pop %v67
    %v75 = vmul.f32 %v74, 0.6931472
    %v76 = vlog2.pop %v70
    %v77 = vmul.f32 %v76, 0.6931472
    %v78 = vlog2.pop %v73
    %v79 = vmul.f32 %v78, 0.6931472
    %v80 = vsel %vm46, %v43, 0.0
    %81 = vadd.xlane.f32.xlu0 %v80
    %v82 = vpop.xlane.xlu0 %81
    %v83 = vsel %vm46, %v44, 0.0
    %84 = vadd.xlane.f32.xlu0 %v83
    %v85 = vpop.xlane.xlu0 %84
    %v86 = vsel %vm46, %v45, 0.0
    %87 = vadd.xlane.f32.xlu0 %v86
    %v88 = vpop.xlane.xlu0 %87
    %v89 = vmul.f32 %v43, %v40
    %v90 = vmul.f32 %v44, %v41
    %v91 = vmul.f32 %v45, %v42
    %v92 = vsel %vm46, %v89, 0.0
    %93 = vadd.xlane.f32.xlu0 %v92
    %v94 = vpop.xlane.xlu0 %93
    %v95 = vsel %vm46, %v90, 0.0
    %96 = vadd.xlane.f32.xlu0 %v95
    %v97 = vpop.xlane.xlu0 %96
    %v98 = vsel %vm46, %v91, 0.0
    %99 = vadd.xlane.f32.xlu0 %v98
    %v100 = vpop.xlane.xlu0 %99
    %v101 = vadd.f32 %v49, %v75
    %v102 = vadd.f32 %v52, %v77
    %v103 = vadd.f32 %v55, %v79
    %v104 = vmul.f32 %v101, %v82
    %v105 = vmul.f32 %v102, %v85
    %v106 = vmul.f32 %v103, %v88
    %v107 = vsub.f32 %v104, %v94
    %v108 = vsub.f32 %v105, %v97
    %v109 = vsub.f32 %v106, %v100
    %s110 = smul.u32 0, 24
    %v111 = vlaneseq
    %v112 = vshrl.u32 %v111, 7
    %v113 = vadd.s32 %v112, 8
    %v114 = vadd.s32 %v112, 16
    %v115 = vstv %s110
    %v116 = vadd.s32 %v115, %v112
    %v117 = vadd.s32 %v115, %v113
    %v118 = vadd.s32 %v115, %v114
    %vm119 = vcmp.lt.s32.totalorder %v116, 18
    %vm120 = vcmp.lt.s32.totalorder %v117, 18
    %vm121 = vcmp.lt.s32.totalorder %v118, 18
    %v122 = vsel %vm119, %v107, 0.0
    %v123 = vsel %vm120, %v108, 0.0
    %v124 = vsel %vm121, %v109, 0.0
    %vm125 = vcmask 7168
    %v126 = vsel %vm125, %v122, 0.0
    %v127 = vsel %vm125, %v123, 0.0
    %v128 = vadd.f32 %v126, %v127
    %v129 = vsel %vm125, %v124, 0.0
    %v130 = vadd.f32 %v128, %v129
    %131 = vadd.xlane.f32.xlu0 %v130
    %v132 = vpop.xlane.xlu0 %131
    %v133 = vrot.slane %v132, 4
    %v134 = vadd.f32 %v132, %v133
    %v135 = vrot.slane %v134, 2
    %v136 = vadd.f32 %v134, %v135
    %v137 = vrot.slane %v136, 1
    %v138 = vadd.f32 %v136, %v137
    %s139 = vtos %v138
    %s140 = scalar_lea.smem [#allocation7], 0
    %141 = sst [smem:[%s140]] %s139
    // Predicated region
    $region18: #{tpu_custom_call.1} parent=1 // pred_check
      _
    $region19: #{tpu_custom_call.1} parent=1 // pred_check_branch
      %143 = sbr.rel (0) target = $region21
    $region20: #{tpu_custom_call.1} parent=1 // pred_region
      %s145 = ssub.s32 16, 16
      %146 = vsyncadd [#allocation4], %s145
      %149 = dma.smem_to_hbm [#allocation7], 16, %s2, [#allocation4]
    $region21: #{tpu_custom_call.1} parent=1 // pred_fallthru
      _
    // Predicated region
    $region22: #{tpu_custom_call.1} parent=1 // pred_check
      _
    $region23: #{tpu_custom_call.1} parent=1 // pred_check_branch
      %151 = sbr.rel (0) target = $region25
    $region24: #{tpu_custom_call.1} parent=1 // pred_region
      %152 = dma.done [#allocation4], 16
    $region25: #{tpu_custom_call.1} parent=1 // pred_fallthru
      _
    %153 = sfence
    %154 = vsyncpa [#allocation3], 1
    %155 = vsyncpa [#allocation6], 1
    %156 = vsyncpa [#allocation4], 1

</llo_original>
